<compile_context>
chip_gen: v7x
topology: tpu7x:2x2x1
jax: 0.10.0
libtpu: 0.0.40
codegen_flags: <defaults>
</compile_context>

<pallas_src>
import jax
import jax.numpy as jnp
from jax.experimental import pallas as pl
from jax.experimental.pallas import tpu as pltpu


N_ITER = 5  # IterativeModule(n_iter=5); forward is idempotent across iterations.


def _iterative_kernel(x_ref, w_ref, b_ref, o_ref):
    """One (batch-pack, pixel-tile) block of z = relu(w_sum @ x + b).

    x_ref : (Bt, C, TP) input block in the caller's dtype
            (channels on sublanes, pixels lane-dense)
    w_ref : (C, C)  f32 folded weight (wx + wm), PyTorch (out_ch, in_ch) convention
    b_ref : (C, 1)  f32 bias column
    o_ref : (Bt, C, TP) output block (last iterate z), caller's dtype
    """
    w = w_ref[...]
    b = b_ref[...]
    bt_pack, c_in, _ = x_ref.shape

    for bt in range(bt_pack):  # static, fully unrolled (Bt is tiny)
        xb = x_ref[bt].astype(jnp.float32)  # upcast in-register, no wrapper HBM pass
        if c_in <= 8:
            # Tiny channel count (<= one sublane group): the MXU would be <1%
            # utilized, so do C broadcast-FMA passes on the VPU over the
            # lane-dense pixel axis (static Python loop, fully unrolled).
            acc = w[:, 0:1] * xb[0:1, :]
            for k in range(1, c_in):
                acc = acc + w[:, k:k + 1] * xb[k:k + 1, :]
        else:
            # C > 8: padded K=N=C matmul on the MXU hides under the DMA stream.
            acc = jnp.dot(w, xb, preferred_element_type=jnp.float32)
        o_ref[bt] = jnp.maximum(acc + b, 0.0).astype(o_ref.dtype)


def _vmem_capacity_bytes():
    """Physical VMEM per TensorCore; conservative (v7x 64 MiB) if unknown."""
    try:
        cap = getattr(pltpu.get_tpu_info(), "vmem_capacity_bytes", None)
        if cap:
            return int(cap)
    except Exception:
        pass
    return 64 << 20


def _plan_tiles(B, C, HW_pad, x_itemsize, out_itemsize, vmem_budget):
    """Pick (Bt, tp): batches packed per grid step and pixel-tile width."""
    # Grid-constant folded weight + bias (budget the double-buffered worst case).
    fixed = 2 * (C * C + C) * 4
    avail = max(vmem_budget - fixed, 2 << 20)
    # Bytes per (batch, pixel) column with the default double-buffered x and out.
    per_col = C * 2 * (x_itemsize + out_itemsize)
    max_cols = max(avail // per_col, 128)

    # Pixel tile: largest multiple-of-128 divisor of HW_pad within the VMEM budget
    # (kernel is HBM-bound at AI ~ C/4, so bigger tiles amortize per-step overhead).
    if HW_pad % 128 == 0:
        tp = 128
        while tp * 2 <= min(max_cols, HW_pad) and HW_pad % (tp * 2) == 0:
            tp *= 2
    else:
        tp = HW_pad  # HW_pad < 128: full-extent last dim is a legal block

    # Pack several batches per grid step when blocks are small (tiny C), without
    # starving the parallel grid.
    Bt = 1
    while (Bt * 2 <= min(B, 8) and B % (Bt * 2) == 0
           and (Bt * 2) * tp <= max_cols
           and (B // (Bt * 2)) * (HW_pad // tp) >= 2):
        Bt *= 2

    # v7x has 2 TensorCores sharded over "parallel" grid axes: keep >= 2 steps.
    while (B // Bt) * (HW_pad // tp) < 2 and tp >= 256:
        tp //= 2

    return Bt, tp


def _build_call(B, C, HW_pad, Bt, tp, out_dtype, vmem_limit, single_buffer_consts):
    # Grid-constant weight/bias: a second pipeline buffer is pure VMEM waste.
    const_kwargs = {"pipeline_mode": pl.Buffered(1)} if single_buffer_consts else {}
    grid = (B // Bt, HW_pad // tp)
    return pl.pallas_call(
        _iterative_kernel,
        out_shape=jax.ShapeDtypeStruct((B, C, HW_pad), out_dtype),
        grid_spec=pltpu.PrefetchScalarGridSpec(
            num_scalar_prefetch=0,
            grid=grid,
            in_specs=[
                # x tile: (Bt, C, TP) lane-dense block in native dtype
                pl.BlockSpec((Bt, C, tp), lambda bi, pi: (bi, 0, pi)),
                # folded weight, resident across the whole grid (constant index)
                pl.BlockSpec((C, C), lambda bi, pi: (0, 0), **const_kwargs),
                # bias column, resident
                pl.BlockSpec((C, 1), lambda bi, pi: (0, 0), **const_kwargs),
            ],
            out_specs=pl.BlockSpec((Bt, C, tp), lambda bi, pi: (bi, 0, pi)),
        ),
        compiler_params=pltpu.CompilerParams(
            dimension_semantics=("parallel", "parallel"),
            vmem_limit_bytes=vmem_limit),
    )


def iterative_module_forward(x_nchw, wx, wm, b):
    """Forward of IterativeModule(inner_1x1_conv_module, n_iter=N_ITER).

    x_nchw : (B, C, H, W) any float dtype
    wx, wm : (C, C) -- 1x1 conv weights, (out_ch, in_ch) PyTorch convention
    b      : (C,)   -- bias
    returns: (B, C, H, W) in x's dtype -- last iterate z
    """
    assert N_ITER >= 1, "IterativeModule forward is undefined for n_iter == 0"
    B, C, H, W = x_nchw.shape
    HW = H * W

    # NCHW -> (B, C, H*W): pure reshape, channels on sublanes, pixels lane-dense.
    x_flat = x_nchw.reshape(B, C, HW)

    # Pad pixel axis once to a multiple of 128 so stores stay unmasked full-lane vst.
    if HW >= 128 and HW % 128 != 0:
        HW_pad = ((HW + 127) // 128) * 128
        x_flat = jnp.pad(x_flat, ((0, 0), (0, 0), (0, HW_pad - HW)))
    else:
        HW_pad = HW

    # additional_input == x  =>  wx@x + wm@x == (wx+wm)@x : fold, stream x once.
    w_sum = (wx + wm).astype(jnp.float32)
    b_col = b.reshape(C, 1).astype(jnp.float32)

    vmem_cap = _vmem_capacity_bytes()
    vmem_limit = min(int(vmem_cap * 0.75), 100 << 20)  # generation-aware scoped limit
    x_bytes = jnp.dtype(x_nchw.dtype).itemsize
    Bt, tp = _plan_tiles(B, C, HW_pad, x_bytes, x_bytes, int(vmem_limit * 0.9))

    out_flat, err = None, None
    # Prefer single-buffering the grid-constant weight/bias; fall back to the
    # default pipelining if this Pallas/Mosaic build rejects pl.Buffered(1).
    for single_buffer in (True, False):
        try:
            call = _build_call(B, C, HW_pad, Bt, tp, x_nchw.dtype, vmem_limit,
                               single_buffer)
            out_flat = call(x_flat, w_sum, b_col)
            break
        except Exception as e:  # pragma: no cover - depends on jax build
            err = e
    if out_flat is None:
        raise err

    if HW_pad != HW:
        out_flat = out_flat[:, :, :HW]
    # (B, C, H*W) -> NCHW: pure reshape, no transpose.
    return out_flat.reshape(B, C, H, W)


def _reference_forward(x_nchw, wx, wm, b):
    """Pure-JAX reference of the same forward (mirrors the PyTorch wrapper loop)."""
    B, C, H, W = x_nchw.shape
    x_flat = x_nchw.astype(jnp.float32).reshape(B, C, H * W)
    z = None
    for _ in range(N_ITER):  # identical every iteration, matching IterativeModule
        pre = (jnp.einsum('ok,bkp->bop', wx, x_flat)
               + jnp.einsum('ok,bkp->bop', wm, x_flat)
               + b[None, :, None])
        z = jnp.maximum(pre, 0.0)
    return z.reshape(B, C, H, W)


if __name__ == "__main__":
    key = jax.random.PRNGKey(0)
    kx, kwx, kwm, kb = jax.random.split(key, 4)

    B, C, H, W = 2, 4, 16, 16
    x = jax.random.normal(kx, (B, C, H, W), dtype=jnp.float32)

    # Deterministic synthetic parameters for the inner 1x1-conv module.
    wx = jax.random.normal(kwx, (C, C), dtype=jnp.float32) * 0.3
    wm = jax.random.normal(kwm, (C, C), dtype=jnp.float32) * 0.3
    b = jax.random.normal(kb, (C,), dtype=jnp.float32) * 0.1

    out = iterative_module_forward(x, wx, wm, b)
    out = jax.block_until_ready(out)

    ref = _reference_forward(x, wx, wm, b)
    assert out.shape == (B, C, H, W)
    assert out.dtype == x.dtype
    assert jnp.allclose(out, ref, atol=1e-5, rtol=1e-5), "mismatch vs reference"

    print("KERNEL_OK")
</pallas_src>

<mosaic_0001>
module attributes {stable_mosaic.version = 11 : i64} {
  func.func @_iterative_kernel(%arg0: i32, %arg1: i32, %arg2: memref<1x4x256xf32, #tpu.memory_space<vmem>>, %arg3: memref<4x4xf32, #tpu.memory_space<vmem>>, %arg4: memref<4x1xf32, #tpu.memory_space<vmem>>, %arg5: memref<1x4x256xf32, #tpu.memory_space<vmem>>) attributes {dimension_semantics = [#tpu.dimension_semantics<parallel>, #tpu.dimension_semantics<parallel>], iteration_bounds = array<i64: 2, 1>, scalar_prefetch = 0 : i64, scratch_operands = 0 : i64, tpu.core_type = #tpu.core_type<tc>, window_params = [{transform_indices = @transform_0, window_bounds = array<i64: 1, 4, 256>}, {pipeline_mode = #tpu.pipeline_mode<synchronous>, transform_indices = @transform_1, window_bounds = array<i64: 4, 4>}, {pipeline_mode = #tpu.pipeline_mode<synchronous>, transform_indices = @transform_2, window_bounds = array<i64: 4, 1>}, {transform_indices = @transform_3, window_bounds = array<i64: 1, 4, 256>}]} {
    %c0 = arith.constant 0 : index
    %c0_0 = arith.constant 0 : index
    %0 = vector.load %arg3[%c0, %c0_0] : memref<4x4xf32, #tpu.memory_space<vmem>>, vector<4x4xf32>
    %c0_1 = arith.constant 0 : index
    %c0_2 = arith.constant 0 : index
    %1 = vector.load %arg4[%c0_1, %c0_2] : memref<4x1xf32, #tpu.memory_space<vmem>>, vector<4x1xf32>
    %c0_3 = arith.constant 0 : index
    %c0_4 = arith.constant 0 : index
    %c0_5 = arith.constant 0 : index
    %2 = vector.load %arg2[%c0_3, %c0_4, %c0_5] : memref<1x4x256xf32, #tpu.memory_space<vmem>>, vector<1x4x256xf32>
    %3 = vector.shape_cast %2 : vector<1x4x256xf32> to vector<4x256xf32>
    %4 = vector.extract_strided_slice %0 {offsets = [0, 0], sizes = [4, 1], strides = [1, 1]} : vector<4x4xf32> to vector<4x1xf32>
    %5 = vector.extract_strided_slice %3 {offsets = [0, 0], sizes = [1, 256], strides = [1, 1]} : vector<4x256xf32> to vector<1x256xf32>
    %6 = vector.broadcast %4 : vector<4x1xf32> to vector<4x256xf32>
    %7 = vector.broadcast %5 : vector<1x256xf32> to vector<4x256xf32>
    %8 = arith.mulf %6, %7 : vector<4x256xf32>
    %9 = vector.extract_strided_slice %0 {offsets = [0, 1], sizes = [4, 1], strides = [1, 1]} : vector<4x4xf32> to vector<4x1xf32>
    %10 = vector.extract_strided_slice %3 {offsets = [1, 0], sizes = [1, 256], strides = [1, 1]} : vector<4x256xf32> to vector<1x256xf32>
    %11 = vector.broadcast %9 : vector<4x1xf32> to vector<4x256xf32>
    %12 = vector.broadcast %10 : vector<1x256xf32> to vector<4x256xf32>
    %13 = arith.mulf %11, %12 : vector<4x256xf32>
    %14 = arith.addf %8, %13 : vector<4x256xf32>
    %15 = vector.extract_strided_slice %0 {offsets = [0, 2], sizes = [4, 1], strides = [1, 1]} : vector<4x4xf32> to vector<4x1xf32>
    %16 = vector.extract_strided_slice %3 {offsets = [2, 0], sizes = [1, 256], strides = [1, 1]} : vector<4x256xf32> to vector<1x256xf32>
    %17 = vector.broadcast %15 : vector<4x1xf32> to vector<4x256xf32>
    %18 = vector.broadcast %16 : vector<1x256xf32> to vector<4x256xf32>
    %19 = arith.mulf %17, %18 : vector<4x256xf32>
    %20 = arith.addf %14, %19 : vector<4x256xf32>
    %21 = vector.extract_strided_slice %0 {offsets = [0, 3], sizes = [4, 1], strides = [1, 1]} : vector<4x4xf32> to vector<4x1xf32>
    %22 = vector.extract_strided_slice %3 {offsets = [3, 0], sizes = [1, 256], strides = [1, 1]} : vector<4x256xf32> to vector<1x256xf32>
    %23 = vector.broadcast %21 : vector<4x1xf32> to vector<4x256xf32>
    %24 = vector.broadcast %22 : vector<1x256xf32> to vector<4x256xf32>
    %25 = arith.mulf %23, %24 : vector<4x256xf32>
    %26 = arith.addf %20, %25 : vector<4x256xf32>
    %27 = vector.broadcast %1 : vector<4x1xf32> to vector<4x256xf32>
    %28 = arith.addf %26, %27 : vector<4x256xf32>
    %cst = arith.constant 0.000000e+00 : f32
    %29 = vector.broadcast %cst : f32 to vector<4x256xf32>
    %30 = arith.maximumf %28, %29 : vector<4x256xf32>
    %c0_6 = arith.constant 0 : index
    %c0_7 = arith.constant 0 : index
    %c0_8 = arith.constant 0 : index
    %31 = vector.load %arg5[%c0_6, %c0_7, %c0_8] : memref<1x4x256xf32, #tpu.memory_space<vmem>>, vector<1x4x256xf32>
    %32 = vector.shape_cast %31 : vector<1x4x256xf32> to vector<4x256xf32>
    %33 = vector.shape_cast %30 : vector<4x256xf32> to vector<1x4x256xf32>
    tpu.vector_store %arg5[%c0_6, %c0_7, %c0_8], %33 {strides = array<i32>} : memref<1x4x256xf32, #tpu.memory_space<vmem>>, vector<1x4x256xf32>,
    return
  }
  func.func @transform_0(%arg0: i32, %arg1: i32) -> (i32, i32, i32) {
    %c0_i32 = arith.constant 0 : i32
    %c0_i32_0 = arith.constant 0 : i32
    return %arg0, %c0_i32, %arg1 : i32, i32, i32
  }
  func.func @transform_1(%arg0: i32, %arg1: i32) -> (i32, i32) {
    %c0_i32 = arith.constant 0 : i32
    %c0_i32_0 = arith.constant 0 : i32
    %c0_i32_1 = arith.constant 0 : i32
    return %c0_i32, %c0_i32_0 : i32, i32
  }
  func.func @transform_2(%arg0: i32, %arg1: i32) -> (i32, i32) {
    %c0_i32 = arith.constant 0 : i32
    %c0_i32_0 = arith.constant 0 : i32
    %c0_i32_1 = arith.constant 0 : i32
    return %c0_i32, %c0_i32_0 : i32, i32
  }
  func.func @transform_3(%arg0: i32, %arg1: i32) -> (i32, i32, i32) {
    %c0_i32 = arith.constant 0 : i32
    %c0_i32_0 = arith.constant 0 : i32
    return %arg0, %c0_i32, %arg1 : i32, i32, i32
  }
}

module attributes {stable_mosaic.version = 11 : i64} {
  func.func @_iterative_kernel(%arg0: i32, %arg1: i32, %arg2: memref<1x4x256xf32, #tpu.memory_space<vmem>>, %arg3: memref<4x4xf32, #tpu.memory_space<vmem>>, %arg4: memref<4x1xf32, #tpu.memory_space<vmem>>, %arg5: memref<1x4x256xf32, #tpu.memory_space<vmem>>) attributes {dimension_semantics = [#tpu.dimension_semantics<parallel>, #tpu.dimension_semantics<parallel>], iteration_bounds = array<i64: 2, 1>, scalar_prefetch = 0 : i64, scratch_operands = 0 : i64, tpu.core_type = #tpu.core_type<tc>, window_params = [{transform_indices = @transform_0, window_bounds = array<i64: 1, 4, 256>}, {pipeline_mode = #tpu.pipeline_mode<synchronous>, transform_indices = @transform_1, window_bounds = array<i64: 4, 4>}, {pipeline_mode = #tpu.pipeline_mode<synchronous>, transform_indices = @transform_2, window_bounds = array<i64: 4, 1>}, {transform_indices = @transform_3, window_bounds = array<i64: 1, 4, 256>}]} {
    %c0 = arith.constant 0 : index
    %c0_0 = arith.constant 0 : index
    %0 = vector.load %arg3[%c0, %c0_0] : memref<4x4xf32, #tpu.memory_space<vmem>>, vector<4x4xf32>
    %c0_1 = arith.constant 0 : index
    %c0_2 = arith.constant 0 : index
    %1 = vector.load %arg4[%c0_1, %c0_2] : memref<4x1xf32, #tpu.memory_space<vmem>>, vector<4x1xf32>
    %c0_3 = arith.constant 0 : index
    %c0_4 = arith.constant 0 : index
    %c0_5 = arith.constant 0 : index
    %2 = vector.load %arg2[%c0_3, %c0_4, %c0_5] : memref<1x4x256xf32, #tpu.memory_space<vmem>>, vector<1x4x256xf32>
    %3 = vector.shape_cast %2 : vector<1x4x256xf32> to vector<4x256xf32>
    %4 = vector.extract_strided_slice %0 {offsets = [0, 0], sizes = [4, 1], strides = [1, 1]} : vector<4x4xf32> to vector<4x1xf32>
    %5 = vector.extract_strided_slice %3 {offsets = [0, 0], sizes = [1, 256], strides = [1, 1]} : vector<4x256xf32> to vector<1x256xf32>
    %6 = vector.broadcast %4 : vector<4x1xf32> to vector<4x256xf32>
    %7 = vector.broadcast %5 : vector<1x256xf32> to vector<4x256xf32>
    %8 = arith.mulf %6, %7 : vector<4x256xf32>
    %9 = vector.extract_strided_slice %0 {offsets = [0, 1], sizes = [4, 1], strides = [1, 1]} : vector<4x4xf32> to vector<4x1xf32>
    %10 = vector.extract_strided_slice %3 {offsets = [1, 0], sizes = [1, 256], strides = [1, 1]} : vector<4x256xf32> to vector<1x256xf32>
    %11 = vector.broadcast %9 : vector<4x1xf32> to vector<4x256xf32>
    %12 = vector.broadcast %10 : vector<1x256xf32> to vector<4x256xf32>
    %13 = arith.mulf %11, %12 : vector<4x256xf32>
    %14 = arith.addf %8, %13 : vector<4x256xf32>
    %15 = vector.extract_strided_slice %0 {offsets = [0, 2], sizes = [4, 1], strides = [1, 1]} : vector<4x4xf32> to vector<4x1xf32>
    %16 = vector.extract_strided_slice %3 {offsets = [2, 0], sizes = [1, 256], strides = [1, 1]} : vector<4x256xf32> to vector<1x256xf32>
    %17 = vector.broadcast %15 : vector<4x1xf32> to vector<4x256xf32>
    %18 = vector.broadcast %16 : vector<1x256xf32> to vector<4x256xf32>
    %19 = arith.mulf %17, %18 : vector<4x256xf32>
    %20 = arith.addf %14, %19 : vector<4x256xf32>
    %21 = vector.extract_strided_slice %0 {offsets = [0, 3], sizes = [4, 1], strides = [1, 1]} : vector<4x4xf32> to vector<4x1xf32>
    %22 = vector.extract_strided_slice %3 {offsets = [3, 0], sizes = [1, 256], strides = [1, 1]} : vector<4x256xf32> to vector<1x256xf32>
    %23 = vector.broadcast %21 : vector<4x1xf32> to vector<4x256xf32>
    %24 = vector.broadcast %22 : vector<1x256xf32> to vector<4x256xf32>
    %25 = arith.mulf %23, %24 : vector<4x256xf32>
    %26 = arith.addf %20, %25 : vector<4x256xf32>
    %27 = vector.broadcast %1 : vector<4x1xf32> to vector<4x256xf32>
    %28 = arith.addf %26, %27 : vector<4x256xf32>
    %cst = arith.constant 0.000000e+00 : f32
    %29 = vector.broadcast %cst : f32 to vector<4x256xf32>
    %30 = arith.maximumf %28, %29 : vector<4x256xf32>
    %c0_6 = arith.constant 0 : index
    %c0_7 = arith.constant 0 : index
    %c0_8 = arith.constant 0 : index
    %31 = vector.load %arg5[%c0_6, %c0_7, %c0_8] : memref<1x4x256xf32, #tpu.memory_space<vmem>>, vector<1x4x256xf32>
    %32 = vector.shape_cast %31 : vector<1x4x256xf32> to vector<4x256xf32>
    %33 = vector.shape_cast %30 : vector<4x256xf32> to vector<1x4x256xf32>
    tpu.vector_store %arg5[%c0_6, %c0_7, %c0_8], %33 {strides = array<i32>} : memref<1x4x256xf32, #tpu.memory_space<vmem>>, vector<1x4x256xf32>,
    return
  }
  func.func @transform_0(%arg0: i32, %arg1: i32) -> (i32, i32, i32) {
    %c0_i32 = arith.constant 0 : i32
    %c0_i32_0 = arith.constant 0 : i32
    return %arg0, %c0_i32, %arg1 : i32, i32, i32
  }
  func.func @transform_1(%arg0: i32, %arg1: i32) -> (i32, i32) {
    %c0_i32 = arith.constant 0 : i32
    %c0_i32_0 = arith.constant 0 : i32
    %c0_i32_1 = arith.constant 0 : i32
    return %c0_i32, %c0_i32_0 : i32, i32
  }
  func.func @transform_2(%arg0: i32, %arg1: i32) -> (i32, i32) {
    %c0_i32 = arith.constant 0 : i32
    %c0_i32_0 = arith.constant 0 : i32
    %c0_i32_1 = arith.constant 0 : i32
    return %c0_i32, %c0_i32_0 : i32, i32
  }
  func.func @transform_3(%arg0: i32, %arg1: i32) -> (i32, i32, i32) {
    %c0_i32 = arith.constant 0 : i32
    %c0_i32_0 = arith.constant 0 : i32
    return %arg0, %c0_i32, %arg1 : i32, i32, i32
  }
}

</mosaic_0001>

<llo_original>
// kernel: tpu_custom_call.1
$region0: #{tpu_custom_call.1}
  #allocation0 [shape = 'u32[]', space=smem, size = 0x4, offset = 0x4, fixed_abs, tag = 'smem constant byte address 0x4 - core index']
  #allocation1 [shape = 'u32[144,128]{1,0:T(1,128)}', space=vmem, size = 0x12000, scoped, tag = 'internal scratch']
  %s0 = inlined_call_operand.hbm [shape: f32[2,4,256], index: 0, kind: input, shape index: {}]
  %s1 = inlined_call_operand.vmem [shape: f32[4,4], index: 1, kind: input, shape index: {}]
  %s2 = inlined_call_operand.vmem [shape: f32[4,1], index: 2, kind: input, shape index: {}]
  %s3 = inlined_call_operand.hbm [shape: f32[2,4,256], index: 3, kind: output, shape index: {}]
  %s4 = sld [smem:[#allocation0]]
  $region49: #{tpu_custom_call.1} parent=0
    _
  %s6 = ssub.s32 1, %s4
  %s7 = scalar_select 0, %s6, %s4
  $region1: #{tpu_custom_call.1} parent=0
    #allocation2 [shape = 'u8[8192]{0}', space=vmem, size = 0x2000, scoped, tag = 'input window, operand 0']
    #allocation3 [shape = 's32[2]{0}', space=sflag, size = 0x8, scoped, tag = 'scoped memory for tpu_custom_call.1']
    #allocation4 [shape = 's32[2]{0}', space=sflag, size = 0x8, scoped, tag = 'scoped memory for tpu_custom_call.1']
    #allocation5 [shape = 'u8[8192]{0}', space=vmem, size = 0x2000, scoped, tag = 'output window, operand 0']
    %8 = vsyncpa [#allocation3], 0
    %s9 = scalar_lea.sflag [#allocation3], 1
    %10 = vsyncpa %s9, 0
    %11 = vsyncpa [#allocation4], 0
    %s12 = scalar_lea.sflag [#allocation4], 1
    %13 = vsyncpa %s12, 0
    loop: start=0, step=1, limit=4
    $region2: #{tpu_custom_call.1} parent=1 // loop_pre_header
      _
    $region3: #{tpu_custom_call.1} parent=1 // loop_header
      %s15 = sphi 0, %s19
      %p16 = scmp.ge.s32.totalorder %s15, 4
      %s22 = sphi 0, %s34
      %s23 = sphi 0, %s30
      %s24 = sphi 0, %s22
      %s25 = sphi 0, %s23
      %s26 = sphi 0, %s24
      %s27 = sphi 0, %s25
      %s39 = sphi 0, %s41
      %s42 = sphi 0, %s39
      %s43 = sphi 0, %s42
      %s59 = sphi 0, %s43
      %s63 = sphi 0, %s63
      %s65 = sphi 0, %s63
      %s66 = sphi 0, %s65
      %s80 = sphi 0, %s66
      %s84 = sphi 0, %s84
      %s86 = sphi 0, %s84
      %s87 = sphi 0, %s86
      %s101 = sphi 0, %s87
      %s109 = sphi 0, %s111
      %s112 = sphi 0, %s109
      %s113 = sphi 0, %s112
      %s129 = sphi 0, %s113
    $region4: #{tpu_custom_call.1} parent=1 // loop_header_branch
      %18 = sbr.rel (%p16) target = $region8
    $region5: #{tpu_custom_call.1} parent=1 // loop_body
      %s20 = ssub.s32 %s15, 1
      %s21 = ssub.s32 %s15, 2
      %s28 = sadd.s32 1, %s23
      %p29 = scmp.ge.s32.totalorder %s28, 1
      %s30 = scalar_select %p29, 0, %s28
      %s31 = sadd.s32 1, %s22
      %s32 = scalar_select %p29, %s31, %s22
      %p33 = scmp.ge.s32.totalorder %s32, 2
      %s34 = scalar_select %p33, 0, %s32
      %s35 = ssub.s32 %s22, %s34
      %s36 = ssub.s32 %s23, %s30
      %s37 = sor.u32 %s35, %s36
      %p38 = scmp.eq.s32.totalorder %s37, 0
      %s40 = sadd.s32 %s39, 1
      %s41 = scalar_select %p38, %s39, %s40
      %p44 = pneg %p38
      %p45 = scmp.eq.s32.totalorder %s15, 1
      %p46 = por %p44, %p45
      %p47 = scmp.ne.s32.totalorder %s39, %s42
      %p48 = scmp.eq.s32.totalorder %s15, 0
      %p49 = por %p47, %p48
      %p50 = scmp.ne.s32.totalorder %s39, %s42
      %p51 = scmp.eq.s32.totalorder %s20, 1
      %p52 = por %p50, %p51
      %p53 = scmp.ne.s32.totalorder %s42, %s43
      %p54 = scmp.eq.s32.totalorder %s20, 0
      %p55 = por %p53, %p54
      %p56 = scmp.ne.s32.totalorder %s42, %s43
      %p57 = scmp.eq.s32.totalorder %s21, 1
      %p58 = por %p56, %p57
      %p60 = scmp.ne.s32.totalorder %s43, %s59
      %p61 = scmp.eq.s32.totalorder %s21, 0
      %p62 = por %p60, %p61
      %s64 = sadd.s32 %s63, 1
      %p67 = scmp.eq.s32.totalorder %s15, 1
      %p68 = scmp.ne.s32.totalorder %s63, %s65
      %p69 = scmp.eq.s32.totalorder %s15, 0
      %p70 = por %p68, %p69
      %p71 = scmp.ne.s32.totalorder %s63, %s65
      %p72 = scmp.eq.s32.totalorder %s20, 1
      %p73 = por %p71, %p72
      %p74 = scmp.ne.s32.totalorder %s65, %s66
      %p75 = scmp.eq.s32.totalorder %s20, 0
      %p76 = por %p74, %p75
      %p77 = scmp.ne.s32.totalorder %s65, %s66
      %p78 = scmp.eq.s32.totalorder %s21, 1
      %p79 = por %p77, %p78
      %p81 = scmp.ne.s32.totalorder %s66, %s80
      %p82 = scmp.eq.s32.totalorder %s21, 0
      %p83 = por %p81, %p82
      %s85 = sadd.s32 %s84, 1
      %p88 = scmp.eq.s32.totalorder %s15, 1
      %p89 = scmp.ne.s32.totalorder %s84, %s86
      %p90 = scmp.eq.s32.totalorder %s15, 0
      %p91 = por %p89, %p90
      %p92 = scmp.ne.s32.totalorder %s84, %s86
      %p93 = scmp.eq.s32.totalorder %s20, 1
      %p94 = por %p92, %p93
      %p95 = scmp.ne.s32.totalorder %s86, %s87
      %p96 = scmp.eq.s32.totalorder %s20, 0
      %p97 = por %p95, %p96
      %p98 = scmp.ne.s32.totalorder %s86, %s87
      %p99 = scmp.eq.s32.totalorder %s21, 1
      %p100 = por %p98, %p99
      %p102 = scmp.ne.s32.totalorder %s87, %s101
      %p103 = scmp.eq.s32.totalorder %s21, 0
      %p104 = por %p102, %p103
      %s105 = ssub.s32 %s22, %s34
      %s106 = ssub.s32 %s23, %s30
      %s107 = sor.u32 %s105, %s106
      %p108 = scmp.eq.s32.totalorder %s107, 0
      %s110 = sadd.s32 %s109, 1
      %s111 = scalar_select %p108, %s109, %s110
      %p114 = pneg %p108
      %p115 = scmp.eq.s32.totalorder %s15, 1
      %p116 = por %p114, %p115
      %p117 = scmp.ne.s32.totalorder %s109, %s112
      %p118 = scmp.eq.s32.totalorder %s15, 0
      %p119 = por %p117, %p118
      %p120 = scmp.ne.s32.totalorder %s109, %s112
      %p121 = scmp.eq.s32.totalorder %s20, 1
      %p122 = por %p120, %p121
      %p123 = scmp.ne.s32.totalorder %s112, %s113
      %p124 = scmp.eq.s32.totalorder %s20, 0
      %p125 = por %p123, %p124
      %p126 = scmp.ne.s32.totalorder %s112, %s113
      %p127 = scmp.eq.s32.totalorder %s21, 1
      %p128 = por %p126, %p127
      %p130 = scmp.ne.s32.totalorder %s113, %s129
      %p131 = scmp.eq.s32.totalorder %s21, 0
      %p132 = por %p130, %p131
      %p133 = scmp.le.s32.totalorder 1, %s15
      %p134 = scmp.lt.s32.totalorder %s15, 3
      %p135 = pnand %p133, %p134
      %p136 = pneg %p135
      // Predicated region
      $region9: #{tpu_custom_call.1} parent=5 // pred_check
        _
      $region10: #{tpu_custom_call.1} parent=5 // pred_check_branch
        %138 = sbr.rel (%p135) target = $region12
      $region11: #{tpu_custom_call.1} parent=5 // pred_region
        %s139 = ssub.s32 %s15, 1
        // Predicated region
        $region13: #{tpu_custom_call.1} parent=11 // pred_check
          %p140 = pneg %p76
        $region14: #{tpu_custom_call.1} parent=11 // pred_check_branch
          %142 = sbr.rel (%p140) target = $region16
        $region15: #{tpu_custom_call.1} parent=11 // pred_region
          _
        $region16: #{tpu_custom_call.1} parent=11 // pred_fallthru
          _
        // Predicated region
        $region17: #{tpu_custom_call.1} parent=11 // pred_check
          %p143 = pneg %p97
        $region18: #{tpu_custom_call.1} parent=11 // pred_check_branch
          %145 = sbr.rel (%p143) target = $region20
        $region19: #{tpu_custom_call.1} parent=11 // pred_region
          _
        $region20: #{tpu_custom_call.1} parent=11 // pred_fallthru
          _
      $region12: #{tpu_custom_call.1} parent=5 // pred_fallthru
        _
      %p146 = scmp.lt.s32.totalorder %s15, 2
      // Predicated region
      $region21: #{tpu_custom_call.1} parent=5 // pred_check
        %p147 = pneg %p146
      $region22: #{tpu_custom_call.1} parent=5 // pred_check_branch
        %149 = sbr.rel (%p147) target = $region24
      $region23: #{tpu_custom_call.1} parent=5 // pred_region
        // Predicated region
        $region25: #{tpu_custom_call.1} parent=23 // pred_check
          %p150 = pneg %p49
        $region26: #{tpu_custom_call.1} parent=23 // pred_check_branch
          %152 = sbr.rel (%p150) target = $region28
        $region27: #{tpu_custom_call.1} parent=23 // pred_region
          %s153 = sand.u32 %s39, 1
          %s154 = scalar_lea.sflag [#allocation3], %s153
          %s155 = sand.u32 %s39, 1
          %s156 = smul.addr %s155, 8
          %s157 = scalar_lea.vmem [#allocation2], %s156
          %s158 = smul.u32 2, %s23
          %s160 = ssub.s32 128, 128
          %161 = vsyncadd %s154, %s160
          %s162 = smul.addr %s22, 2
          %s163 = sadd.s32 %s158, %s162
          %s164 = smul.addr %s163, 64
          %s165 = scalar_lea.hbm %s0, %s164
          %s167 = sshll.u32 %s157, 4
          %s168 = int_to_ptr.vmem [resolvable:$true] %s167
          %170 = dma.hbm_to_vmem [thread:$0]  %s165, 128, %s168, %s154
        $region28: #{tpu_custom_call.1} parent=23 // pred_fallthru
          _
      $region24: #{tpu_custom_call.1} parent=5 // pred_fallthru
        _
      %p171 = scmp.le.s32.totalorder 1, %s15
      %p172 = scmp.lt.s32.totalorder %s15, 3
      %p173 = pnand %p171, %p172
      %p174 = pneg %p173
      // Predicated region
      $region29: #{tpu_custom_call.1} parent=5 // pred_check
        _
      $region30: #{tpu_custom_call.1} parent=5 // pred_check_branch
        %176 = sbr.rel (%p173) target = $region32
      $region31: #{tpu_custom_call.1} parent=5 // pred_region
        %s177 = ssub.s32 %s15, 1
        %s178 = sand.u32 %s42, 1
        %s179 = scalar_lea.sflag [#allocation3], %s178
        %s180 = sand.u32 %s42, 1
        %s181 = smul.addr %s180, 8
        %s182 = scalar_lea.vmem [#allocation2], %s181
        // Predicated region
        $region33: #{tpu_custom_call.1} parent=31 // pred_check
          %p183 = pneg %p55
        $region34: #{tpu_custom_call.1} parent=31 // pred_check_branch
          %185 = sbr.rel (%p183) target = $region36
        $region35: #{tpu_custom_call.1} parent=31 // pred_region
          %186 = dma.done %s179, 128
        $region36: #{tpu_custom_call.1} parent=31 // pred_fallthru
          _
        %s187 = sand.u32 %s42, 1
        %s188 = scalar_lea.sflag [#allocation3], %s187
        %s189 = sand.u32 %s42, 1
        %s190 = smul.addr %s189, 8
        %s191 = scalar_lea.vmem [#allocation2], %s190
        %p192 = pneg %p55
        %p193 = pneg %p52
        %p194 = pneg %p76
        %p195 = pneg %p73
        %p196 = pneg %p97
        %p197 = pneg %p94
        %p198 = pneg %p125
        %p199 = pneg %p122
        %s200 = sand.u32 %s112, 1
        %s201 = scalar_lea.sflag [#allocation4], %s200
        %s202 = sand.u32 %s112, 1
        %s203 = smul.addr %s202, 8
        %s204 = scalar_lea.vmem [#allocation5], %s203
        %s205 = smul.u32 2, %s25
        %s206 = smul.u32 2, %s25
        %v207 = vld [vmem:[%s1] sm:$0xf]
        %v208 = vld [vmem:[%s2] sm:$0xf]
        %v209 = vld [vmem:[%s182] sm:$0xff]
        %211 = vset.pattern.permute.xlu0 0
        %212 = vperm.xlu0 %211, %v207
        %v213 = vpop.permute.xlu0 %212
        %v216 = vlaneseq
        %v217 = vshrl.u32 %v216, 7
        %v218 = vsub.s32 0, %v217
        %v219 = vrot.slane %v209, %v218
        %v220 = vlaneseq
        %v221 = vshrl.u32 %v220, 7
        %v222 = vsub.s32 4, %v221
        %v223 = vrot.slane %v209, %v222
        %v226 = vlaneseq
        %v227 = vshrl.u32 %v226, 7
        %v228 = vsub.s32 0, %v227
        %v229 = vrot.slane %v219, %v228
        %v230 = vlaneseq
        %v231 = vshrl.u32 %v230, 7
        %v232 = vsub.s32 0, %v231
        %v233 = vrot.slane %v223, %v232
        %v234 = vmul.f32 %v213, %v229
        %v235 = vmul.f32 %v213, %v233
        %236 = vset.pattern.permute.xlu0 1
        %237 = vperm.xlu0 %236, %v207
        %v238 = vpop.permute.xlu0 %237
        %v240 = vlaneseq
        %v241 = vshrl.u32 %v240, 7
        %v242 = vsub.s32 1, %v241
        %v243 = vrot.slane %v209, %v242
        %v244 = vlaneseq
        %v245 = vshrl.u32 %v244, 7
        %v246 = vsub.s32 5, %v245
        %v247 = vrot.slane %v209, %v246
        %v250 = vlaneseq
        %v251 = vshrl.u32 %v250, 7
        %v252 = vsub.s32 1, %v251
        %v253 = vrot.slane %v243, %v252
        %v254 = vlaneseq
        %v255 = vshrl.u32 %v254, 7
        %v256 = vsub.s32 1, %v255
        %v257 = vrot.slane %v247, %v256
        %v258 = vmul.f32 %v238, %v253
        %v259 = vmul.f32 %v238, %v257
        %v260 = vadd.f32 %v234, %v258
        %v261 = vadd.f32 %v235, %v259
        %262 = vset.pattern.permute.xlu0 2
        %263 = vperm.xlu0 %262, %v207
        %v264 = vpop.permute.xlu0 %263
        %v266 = vlaneseq
        %v267 = vshrl.u32 %v266, 7
        %v268 = vsub.s32 2, %v267
        %v269 = vrot.slane %v209, %v268
        %v270 = vlaneseq
        %v271 = vshrl.u32 %v270, 7
        %v272 = vsub.s32 6, %v271
        %v273 = vrot.slane %v209, %v272
        %v276 = vlaneseq
        %v277 = vshrl.u32 %v276, 7
        %v278 = vsub.s32 2, %v277
        %v279 = vrot.slane %v269, %v278
        %v280 = vlaneseq
        %v281 = vshrl.u32 %v280, 7
        %v282 = vsub.s32 2, %v281
        %v283 = vrot.slane %v273, %v282
        %v284 = vmul.f32 %v264, %v279
        %v285 = vmul.f32 %v264, %v283
        %v286 = vadd.f32 %v260, %v284
        %v287 = vadd.f32 %v261, %v285
        %288 = vset.pattern.permute.xlu0 3
        %289 = vperm.xlu0 %288, %v207
        %v290 = vpop.permute.xlu0 %289
        %v292 = vlaneseq
        %v293 = vshrl.u32 %v292, 7
        %v294 = vsub.s32 3, %v293
        %v295 = vrot.slane %v209, %v294
        %v296 = vlaneseq
        %v297 = vshrl.u32 %v296, 7
        %v298 = vsub.s32 7, %v297
        %v299 = vrot.slane %v209, %v298
        %v302 = vlaneseq
        %v303 = vshrl.u32 %v302, 7
        %v304 = vsub.s32 3, %v303
        %v305 = vrot.slane %v295, %v304
        %v306 = vlaneseq
        %v307 = vshrl.u32 %v306, 7
        %v308 = vsub.s32 3, %v307
        %v309 = vrot.slane %v299, %v308
        %v310 = vmul.f32 %v290, %v305
        %v311 = vmul.f32 %v290, %v309
        %v312 = vadd.f32 %v286, %v310
        %v313 = vadd.f32 %v287, %v311
        %315 = vset.pattern.permute.xlu0 0
        %316 = vperm.xlu0 %315, %v208
        %v317 = vpop.permute.xlu0 %316
        %v319 = vadd.f32 %v312, %v317
        %v320 = vadd.f32 %v313, %v317
        %v321 = vmax.f32 %v319, 0.0
        %v322 = vmax.f32 %v320, 0.0
        %v325 = vcombine.low %v321, %v322
        %327 = vst [vmem:[%s204] sm:$0xff] %v325
        %s328 = sand.u32 %s112, 1
        %s329 = scalar_lea.sflag [#allocation4], %s328
        %s330 = sand.u32 %s112, 1
        %s331 = smul.addr %s330, 8
        %s332 = scalar_lea.vmem [#allocation5], %s331
        // Predicated region
        $region37: #{tpu_custom_call.1} parent=31 // pred_check
          %p333 = pneg %p122
        $region38: #{tpu_custom_call.1} parent=31 // pred_check_branch
          %335 = sbr.rel (%p333) target = $region40
        $region39: #{tpu_custom_call.1} parent=31 // pred_region
          %s336 = smul.u32 2, %s25
          %s338 = ssub.s32 128, 128
          %339 = vsyncadd %s329, %s338
          %s340 = smul.addr %s24, 2
          %s341 = sadd.s32 %s336, %s340
          %s342 = smul.addr %s341, 64
          %s343 = scalar_lea.hbm %s3, %s342
          %s345 = sshll.u32 %s332, 4
          %s346 = int_to_ptr.vmem [resolvable:$true] %s345
          %348 = dma.vmem_to_hbm [thread:$0]  %s346, 128, %s343, %s329
        $region40: #{tpu_custom_call.1} parent=31 // pred_fallthru
          _
      $region32: #{tpu_custom_call.1} parent=5 // pred_fallthru
        _
      %p349 = scmp.le.s32.totalorder 2, %s15
      // Predicated region
      $region41: #{tpu_custom_call.1} parent=5 // pred_check
        %p350 = pneg %p349
      $region42: #{tpu_custom_call.1} parent=5 // pred_check_branch
        %352 = sbr.rel (%p350) target = $region44
      $region43: #{tpu_custom_call.1} parent=5 // pred_region
        %s353 = ssub.s32 %s15, 2
        // Predicated region
        $region45: #{tpu_custom_call.1} parent=43 // pred_check
          %p354 = pneg %p128
        $region46: #{tpu_custom_call.1} parent=43 // pred_check_branch
          %356 = sbr.rel (%p354) target = $region48
        $region47: #{tpu_custom_call.1} parent=43 // pred_region
          %s357 = sand.u32 %s113, 1
          %s358 = scalar_lea.sflag [#allocation4], %s357
          %s359 = sand.u32 %s113, 1
          %s360 = smul.addr %s359, 8
          %s361 = scalar_lea.vmem [#allocation5], %s360
          %362 = dma.done %s358, 128
        $region48: #{tpu_custom_call.1} parent=43 // pred_fallthru
          _
      $region44: #{tpu_custom_call.1} parent=5 // pred_fallthru
        _
    $region6: #{tpu_custom_call.1} parent=1 // loop_footer
      %s19 = sadd.s32 1, %s15
    $region7: #{tpu_custom_call.1} parent=1 // loop_footer_branch
      %14 = sbr.rel target = $region3
    $region8: #{tpu_custom_call.1} parent=1 // loop_exit
      _
    %363 = vsyncpa [#allocation3], 1
    %s364 = scalar_lea.sflag [#allocation3], 1
    %365 = vsyncpa %s364, 1
    %366 = vsyncpa [#allocation4], 1
    %s367 = scalar_lea.sflag [#allocation4], 1
    %368 = vsyncpa %s367, 1

// kernel: tpu_custom_call.1
$region0: #{tpu_custom_call.1}
  #allocation0 [shape = 'u32[]', space=smem, size = 0x4, offset = 0x4, fixed_abs, tag = 'smem constant byte address 0x4 - core index']
  #allocation1 [shape = 'u32[144,128]{1,0:T(1,128)}', space=vmem, size = 0x12000, scoped, tag = 'internal scratch']
  %s0 = inlined_call_operand.hbm [shape: f32[2,4,256], index: 0, kind: input, shape index: {}]
  %s1 = inlined_call_operand.vmem [shape: f32[4,4], index: 1, kind: input, shape index: {}]
  %s2 = inlined_call_operand.vmem [shape: f32[4,1], index: 2, kind: input, shape index: {}]
  %s3 = inlined_call_operand.hbm [shape: f32[2,4,256], index: 3, kind: output, shape index: {}]
  %s4 = sld [smem:[#allocation0]]
  $region49: #{tpu_custom_call.1} parent=0
    _
  %s6 = ssub.s32 1, %s4
  %s7 = scalar_select 0, %s6, %s4
  $region1: #{tpu_custom_call.1} parent=0
    #allocation2 [shape = 'u8[8192]{0}', space=vmem, size = 0x2000, scoped, tag = 'input window, operand 0']
    #allocation3 [shape = 's32[2]{0}', space=sflag, size = 0x8, scoped, tag = 'scoped memory for tpu_custom_call.1']
    #allocation4 [shape = 's32[2]{0}', space=sflag, size = 0x8, scoped, tag = 'scoped memory for tpu_custom_call.1']
    #allocation5 [shape = 'u8[8192]{0}', space=vmem, size = 0x2000, scoped, tag = 'output window, operand 0']
    %8 = vsyncpa [#allocation3], 0
    %s9 = scalar_lea.sflag [#allocation3], 1
    %10 = vsyncpa %s9, 0
    %11 = vsyncpa [#allocation4], 0
    %s12 = scalar_lea.sflag [#allocation4], 1
    %13 = vsyncpa %s12, 0
    loop: start=0, step=1, limit=4
    $region2: #{tpu_custom_call.1} parent=1 // loop_pre_header
      _
    $region3: #{tpu_custom_call.1} parent=1 // loop_header
      %s15 = sphi 0, %s19
      %p16 = scmp.ge.s32.totalorder %s15, 4
      %s22 = sphi 0, %s34
      %s23 = sphi 0, %s30
      %s24 = sphi 0, %s22
      %s25 = sphi 0, %s23
      %s26 = sphi 0, %s24
      %s27 = sphi 0, %s25
      %s39 = sphi 0, %s41
      %s42 = sphi 0, %s39
      %s43 = sphi 0, %s42
      %s59 = sphi 0, %s43
      %s63 = sphi 0, %s63
      %s65 = sphi 0, %s63
      %s66 = sphi 0, %s65
      %s80 = sphi 0, %s66
      %s84 = sphi 0, %s84
      %s86 = sphi 0, %s84
      %s87 = sphi 0, %s86
      %s101 = sphi 0, %s87
      %s109 = sphi 0, %s111
      %s112 = sphi 0, %s109
      %s113 = sphi 0, %s112
      %s129 = sphi 0, %s113
    $region4: #{tpu_custom_call.1} parent=1 // loop_header_branch
      %18 = sbr.rel (%p16) target = $region8
    $region5: #{tpu_custom_call.1} parent=1 // loop_body
      %s20 = ssub.s32 %s15, 1
      %s21 = ssub.s32 %s15, 2
      %s28 = sadd.s32 1, %s23
      %p29 = scmp.ge.s32.totalorder %s28, 1
      %s30 = scalar_select %p29, 0, %s28
      %s31 = sadd.s32 1, %s22
      %s32 = scalar_select %p29, %s31, %s22
      %p33 = scmp.ge.s32.totalorder %s32, 2
      %s34 = scalar_select %p33, 0, %s32
      %s35 = ssub.s32 %s22, %s34
      %s36 = ssub.s32 %s23, %s30
      %s37 = sor.u32 %s35, %s36
      %p38 = scmp.eq.s32.totalorder %s37, 0
      %s40 = sadd.s32 %s39, 1
      %s41 = scalar_select %p38, %s39, %s40
      %p44 = pneg %p38
      %p45 = scmp.eq.s32.totalorder %s15, 1
      %p46 = por %p44, %p45
      %p47 = scmp.ne.s32.totalorder %s39, %s42
      %p48 = scmp.eq.s32.totalorder %s15, 0
      %p49 = por %p47, %p48
      %p50 = scmp.ne.s32.totalorder %s39, %s42
      %p51 = scmp.eq.s32.totalorder %s20, 1
      %p52 = por %p50, %p51
      %p53 = scmp.ne.s32.totalorder %s42, %s43
      %p54 = scmp.eq.s32.totalorder %s20, 0
      %p55 = por %p53, %p54
      %p56 = scmp.ne.s32.totalorder %s42, %s43
      %p57 = scmp.eq.s32.totalorder %s21, 1
      %p58 = por %p56, %p57
      %p60 = scmp.ne.s32.totalorder %s43, %s59
      %p61 = scmp.eq.s32.totalorder %s21, 0
      %p62 = por %p60, %p61
      %s64 = sadd.s32 %s63, 1
      %p67 = scmp.eq.s32.totalorder %s15, 1
      %p68 = scmp.ne.s32.totalorder %s63, %s65
      %p69 = scmp.eq.s32.totalorder %s15, 0
      %p70 = por %p68, %p69
      %p71 = scmp.ne.s32.totalorder %s63, %s65
      %p72 = scmp.eq.s32.totalorder %s20, 1
      %p73 = por %p71, %p72
      %p74 = scmp.ne.s32.totalorder %s65, %s66
      %p75 = scmp.eq.s32.totalorder %s20, 0
      %p76 = por %p74, %p75
      %p77 = scmp.ne.s32.totalorder %s65, %s66
      %p78 = scmp.eq.s32.totalorder %s21, 1
      %p79 = por %p77, %p78
      %p81 = scmp.ne.s32.totalorder %s66, %s80
      %p82 = scmp.eq.s32.totalorder %s21, 0
      %p83 = por %p81, %p82
      %s85 = sadd.s32 %s84, 1
      %p88 = scmp.eq.s32.totalorder %s15, 1
      %p89 = scmp.ne.s32.totalorder %s84, %s86
      %p90 = scmp.eq.s32.totalorder %s15, 0
      %p91 = por %p89, %p90
      %p92 = scmp.ne.s32.totalorder %s84, %s86
      %p93 = scmp.eq.s32.totalorder %s20, 1
      %p94 = por %p92, %p93
      %p95 = scmp.ne.s32.totalorder %s86, %s87
      %p96 = scmp.eq.s32.totalorder %s20, 0
      %p97 = por %p95, %p96
      %p98 = scmp.ne.s32.totalorder %s86, %s87
      %p99 = scmp.eq.s32.totalorder %s21, 1
      %p100 = por %p98, %p99
      %p102 = scmp.ne.s32.totalorder %s87, %s101
      %p103 = scmp.eq.s32.totalorder %s21, 0
      %p104 = por %p102, %p103
      %s105 = ssub.s32 %s22, %s34
      %s106 = ssub.s32 %s23, %s30
      %s107 = sor.u32 %s105, %s106
      %p108 = scmp.eq.s32.totalorder %s107, 0
      %s110 = sadd.s32 %s109, 1
      %s111 = scalar_select %p108, %s109, %s110
      %p114 = pneg %p108
      %p115 = scmp.eq.s32.totalorder %s15, 1
      %p116 = por %p114, %p115
      %p117 = scmp.ne.s32.totalorder %s109, %s112
      %p118 = scmp.eq.s32.totalorder %s15, 0
      %p119 = por %p117, %p118
      %p120 = scmp.ne.s32.totalorder %s109, %s112
      %p121 = scmp.eq.s32.totalorder %s20, 1
      %p122 = por %p120, %p121
      %p123 = scmp.ne.s32.totalorder %s112, %s113
      %p124 = scmp.eq.s32.totalorder %s20, 0
      %p125 = por %p123, %p124
      %p126 = scmp.ne.s32.totalorder %s112, %s113
      %p127 = scmp.eq.s32.totalorder %s21, 1
      %p128 = por %p126, %p127
      %p130 = scmp.ne.s32.totalorder %s113, %s129
      %p131 = scmp.eq.s32.totalorder %s21, 0
      %p132 = por %p130, %p131
      %p133 = scmp.le.s32.totalorder 1, %s15
      %p134 = scmp.lt.s32.totalorder %s15, 3
      %p135 = pnand %p133, %p134
      %p136 = pneg %p135
      // Predicated region
      $region9: #{tpu_custom_call.1} parent=5 // pred_check
        _
      $region10: #{tpu_custom_call.1} parent=5 // pred_check_branch
        %138 = sbr.rel (%p135) target = $region12
      $region11: #{tpu_custom_call.1} parent=5 // pred_region
        %s139 = ssub.s32 %s15, 1
        // Predicated region
        $region13: #{tpu_custom_call.1} parent=11 // pred_check
          %p140 = pneg %p76
        $region14: #{tpu_custom_call.1} parent=11 // pred_check_branch
          %142 = sbr.rel (%p140) target = $region16
        $region15: #{tpu_custom_call.1} parent=11 // pred_region
          _
        $region16: #{tpu_custom_call.1} parent=11 // pred_fallthru
          _
        // Predicated region
        $region17: #{tpu_custom_call.1} parent=11 // pred_check
          %p143 = pneg %p97
        $region18: #{tpu_custom_call.1} parent=11 // pred_check_branch
          %145 = sbr.rel (%p143) target = $region20
        $region19: #{tpu_custom_call.1} parent=11 // pred_region
          _
        $region20: #{tpu_custom_call.1} parent=11 // pred_fallthru
          _
      $region12: #{tpu_custom_call.1} parent=5 // pred_fallthru
        _
      %p146 = scmp.lt.s32.totalorder %s15, 2
      // Predicated region
      $region21: #{tpu_custom_call.1} parent=5 // pred_check
        %p147 = pneg %p146
      $region22: #{tpu_custom_call.1} parent=5 // pred_check_branch
        %149 = sbr.rel (%p147) target = $region24
      $region23: #{tpu_custom_call.1} parent=5 // pred_region
        // Predicated region
        $region25: #{tpu_custom_call.1} parent=23 // pred_check
          %p150 = pneg %p49
        $region26: #{tpu_custom_call.1} parent=23 // pred_check_branch
          %152 = sbr.rel (%p150) target = $region28
        $region27: #{tpu_custom_call.1} parent=23 // pred_region
          %s153 = sand.u32 %s39, 1
          %s154 = scalar_lea.sflag [#allocation3], %s153
          %s155 = sand.u32 %s39, 1
          %s156 = smul.addr %s155, 8
          %s157 = scalar_lea.vmem [#allocation2], %s156
          %s158 = smul.u32 2, %s23
          %s160 = ssub.s32 128, 128
          %161 = vsyncadd %s154, %s160
          %s162 = smul.addr %s22, 2
          %s163 = sadd.s32 %s158, %s162
          %s164 = smul.addr %s163, 64
          %s165 = scalar_lea.hbm %s0, %s164
          %s167 = sshll.u32 %s157, 4
          %s168 = int_to_ptr.vmem [resolvable:$true] %s167
          %170 = dma.hbm_to_vmem [thread:$0]  %s165, 128, %s168, %s154
        $region28: #{tpu_custom_call.1} parent=23 // pred_fallthru
          _
      $region24: #{tpu_custom_call.1} parent=5 // pred_fallthru
        _
      %p171 = scmp.le.s32.totalorder 1, %s15
      %p172 = scmp.lt.s32.totalorder %s15, 3
      %p173 = pnand %p171, %p172
      %p174 = pneg %p173
      // Predicated region
      $region29: #{tpu_custom_call.1} parent=5 // pred_check
        _
      $region30: #{tpu_custom_call.1} parent=5 // pred_check_branch
        %176 = sbr.rel (%p173) target = $region32
      $region31: #{tpu_custom_call.1} parent=5 // pred_region
        %s177 = ssub.s32 %s15, 1
        %s178 = sand.u32 %s42, 1
        %s179 = scalar_lea.sflag [#allocation3], %s178
        %s180 = sand.u32 %s42, 1
        %s181 = smul.addr %s180, 8
        %s182 = scalar_lea.vmem [#allocation2], %s181
        // Predicated region
        $region33: #{tpu_custom_call.1} parent=31 // pred_check
          %p183 = pneg %p55
        $region34: #{tpu_custom_call.1} parent=31 // pred_check_branch
          %185 = sbr.rel (%p183) target = $region36
        $region35: #{tpu_custom_call.1} parent=31 // pred_region
          %186 = dma.done %s179, 128
        $region36: #{tpu_custom_call.1} parent=31 // pred_fallthru
          _
        %s187 = sand.u32 %s42, 1
        %s188 = scalar_lea.sflag [#allocation3], %s187
        %s189 = sand.u32 %s42, 1
        %s190 = smul.addr %s189, 8
        %s191 = scalar_lea.vmem [#allocation2], %s190
        %p192 = pneg %p55
        %p193 = pneg %p52
        %p194 = pneg %p76
        %p195 = pneg %p73
        %p196 = pneg %p97
        %p197 = pneg %p94
        %p198 = pneg %p125
        %p199 = pneg %p122
        %s200 = sand.u32 %s112, 1
        %s201 = scalar_lea.sflag [#allocation4], %s200
        %s202 = sand.u32 %s112, 1
        %s203 = smul.addr %s202, 8
        %s204 = scalar_lea.vmem [#allocation5], %s203
        %s205 = smul.u32 2, %s25
        %s206 = smul.u32 2, %s25
        %v207 = vld [vmem:[%s1] sm:$0xf]
        %v208 = vld [vmem:[%s2] sm:$0xf]
        %v209 = vld [vmem:[%s182] sm:$0xff]
        %211 = vset.pattern.permute.xlu0 0
        %212 = vperm.xlu0 %211, %v207
        %v213 = vpop.permute.xlu0 %212
        %v216 = vlaneseq
        %v217 = vshrl.u32 %v216, 7
        %v218 = vsub.s32 0, %v217
        %v219 = vrot.slane %v209, %v218
        %v220 = vlaneseq
        %v221 = vshrl.u32 %v220, 7
        %v222 = vsub.s32 4, %v221
        %v223 = vrot.slane %v209, %v222
        %v226 = vlaneseq
        %v227 = vshrl.u32 %v226, 7
        %v228 = vsub.s32 0, %v227
        %v229 = vrot.slane %v219, %v228
        %v230 = vlaneseq
        %v231 = vshrl.u32 %v230, 7
        %v232 = vsub.s32 0, %v231
        %v233 = vrot.slane %v223, %v232
        %v234 = vmul.f32 %v213, %v229
        %v235 = vmul.f32 %v213, %v233
        %236 = vset.pattern.permute.xlu0 1
        %237 = vperm.xlu0 %236, %v207
        %v238 = vpop.permute.xlu0 %237
        %v240 = vlaneseq
        %v241 = vshrl.u32 %v240, 7
        %v242 = vsub.s32 1, %v241
        %v243 = vrot.slane %v209, %v242
        %v244 = vlaneseq
        %v245 = vshrl.u32 %v244, 7
        %v246 = vsub.s32 5, %v245
        %v247 = vrot.slane %v209, %v246
        %v250 = vlaneseq
        %v251 = vshrl.u32 %v250, 7
        %v252 = vsub.s32 1, %v251
        %v253 = vrot.slane %v243, %v252
        %v254 = vlaneseq
        %v255 = vshrl.u32 %v254, 7
        %v256 = vsub.s32 1, %v255
        %v257 = vrot.slane %v247, %v256
        %v258 = vmul.f32 %v238, %v253
        %v259 = vmul.f32 %v238, %v257
        %v260 = vadd.f32 %v234, %v258
        %v261 = vadd.f32 %v235, %v259
        %262 = vset.pattern.permute.xlu0 2
        %263 = vperm.xlu0 %262, %v207
        %v264 = vpop.permute.xlu0 %263
        %v266 = vlaneseq
        %v267 = vshrl.u32 %v266, 7
        %v268 = vsub.s32 2, %v267
        %v269 = vrot.slane %v209, %v268
        %v270 = vlaneseq
        %v271 = vshrl.u32 %v270, 7
        %v272 = vsub.s32 6, %v271
        %v273 = vrot.slane %v209, %v272
        %v276 = vlaneseq
        %v277 = vshrl.u32 %v276, 7
        %v278 = vsub.s32 2, %v277
        %v279 = vrot.slane %v269, %v278
        %v280 = vlaneseq
        %v281 = vshrl.u32 %v280, 7
        %v282 = vsub.s32 2, %v281
        %v283 = vrot.slane %v273, %v282
        %v284 = vmul.f32 %v264, %v279
        %v285 = vmul.f32 %v264, %v283
        %v286 = vadd.f32 %v260, %v284
        %v287 = vadd.f32 %v261, %v285
        %288 = vset.pattern.permute.xlu0 3
        %289 = vperm.xlu0 %288, %v207
        %v290 = vpop.permute.xlu0 %289
        %v292 = vlaneseq
        %v293 = vshrl.u32 %v292, 7
        %v294 = vsub.s32 3, %v293
        %v295 = vrot.slane %v209, %v294
        %v296 = vlaneseq
        %v297 = vshrl.u32 %v296, 7
        %v298 = vsub.s32 7, %v297
        %v299 = vrot.slane %v209, %v298
        %v302 = vlaneseq
        %v303 = vshrl.u32 %v302, 7
        %v304 = vsub.s32 3, %v303
        %v305 = vrot.slane %v295, %v304
        %v306 = vlaneseq
        %v307 = vshrl.u32 %v306, 7
        %v308 = vsub.s32 3, %v307
        %v309 = vrot.slane %v299, %v308
        %v310 = vmul.f32 %v290, %v305
        %v311 = vmul.f32 %v290, %v309
        %v312 = vadd.f32 %v286, %v310
        %v313 = vadd.f32 %v287, %v311
        %315 = vset.pattern.permute.xlu0 0
        %316 = vperm.xlu0 %315, %v208
        %v317 = vpop.permute.xlu0 %316
        %v319 = vadd.f32 %v312, %v317
        %v320 = vadd.f32 %v313, %v317
        %v321 = vmax.f32 %v319, 0.0
        %v322 = vmax.f32 %v320, 0.0
        %v325 = vcombine.low %v321, %v322
        %327 = vst [vmem:[%s204] sm:$0xff] %v325
        %s328 = sand.u32 %s112, 1
        %s329 = scalar_lea.sflag [#allocation4], %s328
        %s330 = sand.u32 %s112, 1
        %s331 = smul.addr %s330, 8
        %s332 = scalar_lea.vmem [#allocation5], %s331
        // Predicated region
        $region37: #{tpu_custom_call.1} parent=31 // pred_check
          %p333 = pneg %p122
        $region38: #{tpu_custom_call.1} parent=31 // pred_check_branch
          %335 = sbr.rel (%p333) target = $region40
        $region39: #{tpu_custom_call.1} parent=31 // pred_region
          %s336 = smul.u32 2, %s25
          %s338 = ssub.s32 128, 128
          %339 = vsyncadd %s329, %s338
          %s340 = smul.addr %s24, 2
          %s341 = sadd.s32 %s336, %s340
          %s342 = smul.addr %s341, 64
          %s343 = scalar_lea.hbm %s3, %s342
          %s345 = sshll.u32 %s332, 4
          %s346 = int_to_ptr.vmem [resolvable:$true] %s345
          %348 = dma.vmem_to_hbm [thread:$0]  %s346, 128, %s343, %s329
        $region40: #{tpu_custom_call.1} parent=31 // pred_fallthru
          _
      $region32: #{tpu_custom_call.1} parent=5 // pred_fallthru
        _
      %p349 = scmp.le.s32.totalorder 2, %s15
      // Predicated region
      $region41: #{tpu_custom_call.1} parent=5 // pred_check
        %p350 = pneg %p349
      $region42: #{tpu_custom_call.1} parent=5 // pred_check_branch
        %352 = sbr.rel (%p350) target = $region44
      $region43: #{tpu_custom_call.1} parent=5 // pred_region
        %s353 = ssub.s32 %s15, 2
        // Predicated region
        $region45: #{tpu_custom_call.1} parent=43 // pred_check
          %p354 = pneg %p128
        $region46: #{tpu_custom_call.1} parent=43 // pred_check_branch
          %356 = sbr.rel (%p354) target = $region48
        $region47: #{tpu_custom_call.1} parent=43 // pred_region
          %s357 = sand.u32 %s113, 1
          %s358 = scalar_lea.sflag [#allocation4], %s357
          %s359 = sand.u32 %s113, 1
          %s360 = smul.addr %s359, 8
          %s361 = scalar_lea.vmem [#allocation5], %s360
          %362 = dma.done %s358, 128
        $region48: #{tpu_custom_call.1} parent=43 // pred_fallthru
          _
      $region44: #{tpu_custom_call.1} parent=5 // pred_fallthru
        _
    $region6: #{tpu_custom_call.1} parent=1 // loop_footer
      %s19 = sadd.s32 1, %s15
    $region7: #{tpu_custom_call.1} parent=1 // loop_footer_branch
      %14 = sbr.rel target = $region3
    $region8: #{tpu_custom_call.1} parent=1 // loop_exit
      _
    %363 = vsyncpa [#allocation3], 1
    %s364 = scalar_lea.sflag [#allocation3], 1
    %365 = vsyncpa %s364, 1
    %366 = vsyncpa [#allocation4], 1
    %s367 = scalar_lea.sflag [#allocation4], 1
    %368 = vsyncpa %s367, 1

</llo_original>
